<compile_context>
chip_gen: v7x
topology: tpu7x:2x2x1
jax: 0.10.0
libtpu: 0.0.40
codegen_flags: <defaults>
</compile_context>

<pallas_src>
from functools import partial

import jax
import jax.numpy as jnp
from jax import lax
from jax.experimental import pallas as pl
from jax.experimental.pallas import tpu as pltpu


def _myloss_kernel(tgt_ref, pred_ref, pro_l_hbm, drug_l_hbm, a1_hbm, a2_hbm,
                   out_ref,
                   acc_ref, pro_l_v, drug_l_v, a1_v, a2_v, sems,
                   *, lambda1, lambda2, inv_n, block_rows, n_cols,
                   num_blocks, valid_tail):
    i = pl.program_id(0)

    @pl.when(i == 0)
    def _init():
        acc_ref[...] = jnp.zeros_like(acc_ref)
        # Kick off the graph-input fetches; they complete under the BCE loop.
        pltpu.make_async_copy(pro_l_hbm, pro_l_v, sems.at[0]).start()
        pltpu.make_async_copy(drug_l_hbm, drug_l_v, sems.at[1]).start()
        pltpu.make_async_copy(a1_hbm, a1_v, sems.at[2]).start()
        pltpu.make_async_copy(a2_hbm, a2_v, sems.at[3]).start()

    # ---- BCE-with-logits partial sums over this row block ------------------
    x = pred_ref[...].astype(jnp.float32)          # logits
    z = tgt_ref[...].astype(jnp.float32)           # labels
    # Numerically stable: max(x,0) - x*z + log1p(exp(-|x|))
    bce = jnp.maximum(x, 0.0) - x * z + jnp.log1p(jnp.exp(-jnp.abs(x)))

    def _accumulate(vals):
        if block_rows % 8 == 0:
            # Pure VALU adds into the (8, n_cols) accumulator; no reduce here.
            acc_ref[...] += vals.reshape(block_rows // 8, 8, n_cols).sum(axis=0)
        else:
            acc_ref[0:1, :] += jnp.sum(vals, axis=0, keepdims=True)

    if valid_tail == block_rows:
        # Rows divide evenly into blocks: no masking anywhere.
        _accumulate(bce)
    else:
        @pl.when(i != num_blocks - 1)
        def _full_block():
            _accumulate(bce)

        @pl.when(i == num_blocks - 1)
        def _tail_block():
            rmask = lax.broadcasted_iota(jnp.int32, bce.shape, 0) < valid_tail
            _accumulate(jnp.where(rmask, bce, 0.0))

    # ---- quadratic forms + final combine, once, on the last grid step ------
    @pl.when(i == num_blocks - 1)
    def _finalize():
        pltpu.make_async_copy(pro_l_hbm, pro_l_v, sems.at[0]).wait()
        pltpu.make_async_copy(drug_l_hbm, drug_l_v, sems.at[1]).wait()
        pltpu.make_async_copy(a1_hbm, a1_v, sems.at[2]).wait()
        pltpu.make_async_copy(a2_hbm, a2_v, sems.at[3]).wait()

        # trace(A^T L A) == sum((L @ A) * A); exact, no symmetry required.
        a2 = a2_v[...].astype(jnp.float32)
        drug_reg = jnp.sum(
            jnp.dot(drug_l_v[...].astype(jnp.float32), a2,
                    preferred_element_type=jnp.float32) * a2)
        a1 = a1_v[...].astype(jnp.float32)
        pro_reg = jnp.sum(
            jnp.dot(pro_l_v[...].astype(jnp.float32), a1,
                    preferred_element_type=jnp.float32) * a1)

        graph_reg = lambda1 * drug_reg + lambda2 * pro_reg
        closs = jnp.sum(acc_ref[...]) * inv_n
        out_ref[0] = 0.7 * closs + 0.3 * graph_reg


def myloss(target, prediction, pro_l, drug_l, alpha1, alpha2, lambda1, lambda2):
    """Pallas equivalent of Myloss.forward.  Returns a scalar f32 loss."""
    prediction = jnp.asarray(prediction)
    target = jnp.asarray(target)
    pro_l = jnp.asarray(pro_l)
    drug_l = jnp.asarray(drug_l)
    alpha1 = jnp.asarray(alpha1)
    alpha2 = jnp.asarray(alpha2)

    # Match the module's t.tensor(target, dtype=float32) only when needed
    # (bool / int labels); floating inputs are cast on the VPU inside the kernel.
    if not jnp.issubdtype(target.dtype, jnp.floating):
        target = target.astype(jnp.float32)
    if not jnp.issubdtype(prediction.dtype, jnp.floating):
        prediction = prediction.astype(jnp.float32)

    # Natural 2-D views (leading-dim merge is layout-free; no pad, no HBM copy).
    if prediction.ndim == 0:
        pred2d = prediction.reshape(1, 1)
        tgt2d = target.reshape(1, 1)
    elif prediction.ndim == 1:
        pred2d = prediction.reshape(1, -1)
        tgt2d = target.reshape(1, -1)
    else:
        pred2d = prediction.reshape(-1, prediction.shape[-1])
        tgt2d = target.reshape(-1, target.shape[-1])

    n_rows, n_cols = pred2d.shape
    n_valid = n_rows * n_cols

    # --- pick the row block from a VMEM byte budget --------------------------
    bytes_per_row = n_cols * (pred2d.dtype.itemsize + tgt2d.dtype.itemsize)
    budget = 4 << 20                                   # ~4 MiB/step for both streams
    br = max(8, min(budget // max(bytes_per_row, 1), 8192))
    br = (br // 8) * 8                                 # multiple of 8 (sublane rule)
    block_rows = n_rows if n_rows <= br else br        # full-dims block if it all fits
    num_blocks = int(pl.cdiv(n_rows, block_rows))
    valid_tail = n_rows - (num_blocks - 1) * block_rows

    n_drug = drug_l.shape[0]
    n_pro = pro_l.shape[0]
    k_lat = alpha1.shape[-1] if alpha1.ndim > 1 else 1

    cost = pl.CostEstimate(
        flops=int(2 * k_lat * n_drug * n_drug + 2 * k_lat * n_pro * n_pro
                  + 2 * k_lat * (n_drug + n_pro) + 8 * n_valid),
        transcendentals=int(2 * n_valid),
        bytes_accessed=int(pred2d.nbytes + tgt2d.nbytes + pro_l.nbytes
                           + drug_l.nbytes + alpha1.nbytes + alpha2.nbytes + 4),
    )

    # --- explicit VMEM limit sized to the real footprint ---------------------
    stream_bytes = 2 * block_rows * bytes_per_row            # double-buffered BCE stream
    graph_bytes = (pro_l.nbytes + drug_l.nbytes + alpha1.nbytes + alpha2.nbytes)
    acc_bytes = 8 * max(n_cols, 128) * 4
    needed = stream_bytes + graph_bytes + acc_bytes
    vmem_limit = int(min(max(needed + (4 << 20), 32 << 20), 112 << 20))

    kernel = partial(_myloss_kernel,
                     lambda1=float(lambda1), lambda2=float(lambda2),
                     inv_n=1.0 / float(n_valid), block_rows=block_rows,
                     n_cols=n_cols, num_blocks=num_blocks, valid_tail=valid_tail)

    out = pl.pallas_call(
        kernel,
        out_shape=jax.ShapeDtypeStruct((1,), jnp.float32),
        grid=(num_blocks,),
        in_specs=[
            pl.BlockSpec((block_rows, n_cols), lambda i: (i, 0)),   # target
            pl.BlockSpec((block_rows, n_cols), lambda i: (i, 0)),   # prediction
            pl.BlockSpec(memory_space=pl.ANY),                      # pro_l  (manual DMA)
            pl.BlockSpec(memory_space=pl.ANY),                      # drug_l (manual DMA)
            pl.BlockSpec(memory_space=pl.ANY),                      # alpha1 (manual DMA)
            pl.BlockSpec(memory_space=pl.ANY),                      # alpha2 (manual DMA)
        ],
        out_specs=pl.BlockSpec(memory_space=pltpu.MemorySpace.SMEM),
        scratch_shapes=[
            pltpu.VMEM((8, n_cols), jnp.float32),                   # vector accumulator
            pltpu.VMEM(pro_l.shape, pro_l.dtype),
            pltpu.VMEM(drug_l.shape, drug_l.dtype),
            pltpu.VMEM(alpha1.shape, alpha1.dtype),
            pltpu.VMEM(alpha2.shape, alpha2.dtype),
            pltpu.SemaphoreType.DMA((4,)),
        ],
        compiler_params=pltpu.CompilerParams(
            dimension_semantics=("arbitrary",),
            vmem_limit_bytes=vmem_limit),
        cost_estimate=cost,
    )(tgt2d, pred2d, pro_l, drug_l, alpha1, alpha2)
    return out[0]


def _myloss_ref(target, prediction, pro_l, drug_l, alpha1, alpha2,
                lambda1, lambda2):
    """Pure-JAX reference for correctness checking."""
    x = prediction.astype(jnp.float32)
    z = target.astype(jnp.float32)
    bce = jnp.maximum(x, 0.0) - x * z + jnp.log1p(jnp.exp(-jnp.abs(x)))
    closs = jnp.mean(bce)
    drug_reg = jnp.trace(alpha2.T @ drug_l @ alpha2)
    pro_reg = jnp.trace(alpha1.T @ pro_l @ alpha1)
    return 0.7 * closs + 0.3 * (lambda1 * drug_reg + lambda2 * pro_reg)


class Sizes:
    lambda1 = 0.5
    lambda2 = 0.3


if __name__ == "__main__":
    key = jax.random.PRNGKey(0)
    k_pred, k_tgt, k_dl, k_pl, k_a1, k_a2 = jax.random.split(key, 6)

    n_drug, n_pro, k_lat = 16, 8, 4
    sizes = Sizes()

    prediction = jax.random.normal(k_pred, (n_drug, n_pro), dtype=jnp.float32)
    target = (jax.random.uniform(k_tgt, (n_drug, n_pro)) > 0.5).astype(jnp.float32)

    # Deterministic synthetic (non-symmetric) graph Laplacians and embeddings.
    drug_l = jax.random.normal(k_dl, (n_drug, n_drug), dtype=jnp.float32) * 0.1
    pro_l = jax.random.normal(k_pl, (n_pro, n_pro), dtype=jnp.float32) * 0.1
    alpha1 = jax.random.normal(k_a1, (n_pro, k_lat), dtype=jnp.float32)
    alpha2 = jax.random.normal(k_a2, (n_drug, k_lat), dtype=jnp.float32)

    loss = myloss(target, prediction, pro_l, drug_l, alpha1, alpha2,
                  sizes.lambda1, sizes.lambda2)
    loss = jax.block_until_ready(loss)

    ref = _myloss_ref(target, prediction, pro_l, drug_l, alpha1, alpha2,
                      sizes.lambda1, sizes.lambda2)
    assert jnp.allclose(loss, ref, rtol=1e-4, atol=1e-4), (loss, ref)

    print("KERNEL_OK")
</pallas_src>

<mosaic_0001>
module attributes {stable_mosaic.version = 11 : i64} {
  func.func @_myloss_kernel(%arg0: i32, %arg1: memref<16x8xf32, #tpu.memory_space<vmem>>, %arg2: memref<16x8xf32, #tpu.memory_space<vmem>>, %arg3: memref<8x8xf32, #tpu.memory_space<any>>, %arg4: memref<16x16xf32, #tpu.memory_space<any>>, %arg5: memref<8x4xf32, #tpu.memory_space<any>>, %arg6: memref<16x4xf32, #tpu.memory_space<any>>, %arg7: memref<1xf32, #tpu.memory_space<smem>>, %arg8: memref<8x8xf32, #tpu.memory_space<vmem>>, %arg9: memref<8x8xf32, #tpu.memory_space<vmem>>, %arg10: memref<16x16xf32, #tpu.memory_space<vmem>>, %arg11: memref<8x4xf32, #tpu.memory_space<vmem>>, %arg12: memref<16x4xf32, #tpu.memory_space<vmem>>, %arg13: memref<4x!tpu.dma_semaphore, #tpu.memory_space<semaphore_mem>>) attributes {dimension_semantics = [#tpu.dimension_semantics<arbitrary>], iteration_bounds = array<i64: 1>, scalar_prefetch = 0 : i64, scratch_operands = 6 : i64, tpu.core_type = #tpu.core_type<tc>, window_params = [{transform_indices = @transform_0, window_bounds = array<i64: 16, 8>}, {transform_indices = @transform_1, window_bounds = array<i64: 16, 8>}, {}, {}, {}, {}, {transform_indices = @transform_6, window_bounds = array<i64: 1>}]} {
    %c0_i32 = arith.constant 0 : i32
    %0 = arith.cmpi eq, %arg0, %c0_i32 : i32
    %1 = arith.extui %0 : i1 to i32
    %c0_i32_0 = arith.constant 0 : i32
    %2 = arith.cmpi ne, %1, %c0_i32_0 : i32
    scf.if %2 {
      %cst_12 = arith.constant 0.000000e+00 : f32
      %23 = vector.broadcast %cst_12 : f32 to vector<8x8xf32>
      %c0_13 = arith.constant 0 : index
      %c0_14 = arith.constant 0 : index
      %24 = vector.load %arg8[%c0_13, %c0_14] : memref<8x8xf32, #tpu.memory_space<vmem>>, vector<8x8xf32>
      tpu.vector_store %arg8[%c0_13, %c0_14], %23 {strides = array<i32>} : memref<8x8xf32, #tpu.memory_space<vmem>>, vector<8x8xf32>,
      %c0_i32_15 = arith.constant 0 : i32
      %25 = tpu.memref_slice %arg13[%c0_i32_15] : memref<4x!tpu.dma_semaphore, #tpu.memory_space<semaphore_mem>> -> memref<1x!tpu.dma_semaphore, #tpu.memory_space<semaphore_mem>>
      %26 = tpu.memref_squeeze %25 : memref<1x!tpu.dma_semaphore, #tpu.memory_space<semaphore_mem>> -> memref<!tpu.dma_semaphore, #tpu.memory_space<semaphore_mem>>
      tpu.enqueue_dma source(%arg3 : memref<8x8xf32, #tpu.memory_space<any>>) target(%arg9 : memref<8x8xf32, #tpu.memory_space<vmem>>) target_semaphore(%26 : memref<!tpu.dma_semaphore, #tpu.memory_space<semaphore_mem>>)
      %c1_i32 = arith.constant 1 : i32
      %27 = tpu.memref_slice %arg13[%c1_i32] : memref<4x!tpu.dma_semaphore, #tpu.memory_space<semaphore_mem>> -> memref<1x!tpu.dma_semaphore, #tpu.memory_space<semaphore_mem>>
      %28 = tpu.memref_squeeze %27 : memref<1x!tpu.dma_semaphore, #tpu.memory_space<semaphore_mem>> -> memref<!tpu.dma_semaphore, #tpu.memory_space<semaphore_mem>>
      tpu.enqueue_dma source(%arg4 : memref<16x16xf32, #tpu.memory_space<any>>) target(%arg10 : memref<16x16xf32, #tpu.memory_space<vmem>>) target_semaphore(%28 : memref<!tpu.dma_semaphore, #tpu.memory_space<semaphore_mem>>)
      %c2_i32 = arith.constant 2 : i32
      %29 = tpu.memref_slice %arg13[%c2_i32] : memref<4x!tpu.dma_semaphore, #tpu.memory_space<semaphore_mem>> -> memref<1x!tpu.dma_semaphore, #tpu.memory_space<semaphore_mem>>
      %30 = tpu.memref_squeeze %29 : memref<1x!tpu.dma_semaphore, #tpu.memory_space<semaphore_mem>> -> memref<!tpu.dma_semaphore, #tpu.memory_space<semaphore_mem>>
      tpu.enqueue_dma source(%arg5 : memref<8x4xf32, #tpu.memory_space<any>>) target(%arg11 : memref<8x4xf32, #tpu.memory_space<vmem>>) target_semaphore(%30 : memref<!tpu.dma_semaphore, #tpu.memory_space<semaphore_mem>>)
      %c3_i32 = arith.constant 3 : i32
      %31 = tpu.memref_slice %arg13[%c3_i32] : memref<4x!tpu.dma_semaphore, #tpu.memory_space<semaphore_mem>> -> memref<1x!tpu.dma_semaphore, #tpu.memory_space<semaphore_mem>>
      %32 = tpu.memref_squeeze %31 : memref<1x!tpu.dma_semaphore, #tpu.memory_space<semaphore_mem>> -> memref<!tpu.dma_semaphore, #tpu.memory_space<semaphore_mem>>
      tpu.enqueue_dma source(%arg6 : memref<16x4xf32, #tpu.memory_space<any>>) target(%arg12 : memref<16x4xf32, #tpu.memory_space<vmem>>) target_semaphore(%32 : memref<!tpu.dma_semaphore, #tpu.memory_space<semaphore_mem>>)
    } else {
    }
    %c0 = arith.constant 0 : index
    %c0_1 = arith.constant 0 : index
    %3 = vector.load %arg2[%c0, %c0_1] : memref<16x8xf32, #tpu.memory_space<vmem>>, vector<16x8xf32>
    %c0_2 = arith.constant 0 : index
    %c0_3 = arith.constant 0 : index
    %4 = vector.load %arg1[%c0_2, %c0_3] : memref<16x8xf32, #tpu.memory_space<vmem>>, vector<16x8xf32>
    %cst = arith.constant 0.000000e+00 : f32
    %5 = vector.broadcast %cst : f32 to vector<16x8xf32>
    %6 = arith.maximumf %3, %5 : vector<16x8xf32>
    %7 = arith.mulf %3, %4 : vector<16x8xf32>
    %8 = arith.subf %6, %7 : vector<16x8xf32>
    %9 = math.absf %3 : vector<16x8xf32>
    %cst_4 = arith.constant 0.000000e+00 : f32
    %10 = vector.broadcast %cst_4 : f32 to vector<16x8xf32>
    %11 = arith.subf %10, %9 : vector<16x8xf32>
    %12 = math.exp %11 : vector<16x8xf32>
    %13 = math.log1p %12 : vector<16x8xf32>
    %14 = arith.addf %8, %13 : vector<16x8xf32>
    %c0_5 = arith.constant 0 : index
    %c0_6 = arith.constant 0 : index
    %15 = vector.load %arg8[%c0_5, %c0_6] : memref<8x8xf32, #tpu.memory_space<vmem>>, vector<8x8xf32>
    %16 = vector.shape_cast %14 : vector<16x8xf32> to vector<2x8x8xf32>
    %cst_7 = arith.constant dense<0.000000e+00> : vector<8x8xf32>
    %17 = vector.multi_reduction <add>, %16, %cst_7 [0] : vector<2x8x8xf32> to vector<8x8xf32>
    %18 = arith.addf %15, %17 : vector<8x8xf32>
    %c0_8 = arith.constant 0 : index
    %c0_9 = arith.constant 0 : index
    %19 = vector.load %arg8[%c0_8, %c0_9] : memref<8x8xf32, #tpu.memory_space<vmem>>, vector<8x8xf32>
    tpu.vector_store %arg8[%c0_8, %c0_9], %18 {strides = array<i32>} : memref<8x8xf32, #tpu.memory_space<vmem>>, vector<8x8xf32>,
    %c0_i32_10 = arith.constant 0 : i32
    %20 = arith.cmpi eq, %arg0, %c0_i32_10 : i32
    %21 = arith.extui %20 : i1 to i32
    %c0_i32_11 = arith.constant 0 : i32
    %22 = arith.cmpi ne, %21, %c0_i32_11 : i32
    scf.if %22 {
      %c0_i32_12 = arith.constant 0 : i32
      %23 = tpu.memref_slice %arg13[%c0_i32_12] : memref<4x!tpu.dma_semaphore, #tpu.memory_space<semaphore_mem>> -> memref<1x!tpu.dma_semaphore, #tpu.memory_space<semaphore_mem>>
      %24 = tpu.memref_squeeze %23 : memref<1x!tpu.dma_semaphore, #tpu.memory_space<semaphore_mem>> -> memref<!tpu.dma_semaphore, #tpu.memory_space<semaphore_mem>>
      tpu.wait_dma2 semaphore(%24 : memref<!tpu.dma_semaphore, #tpu.memory_space<semaphore_mem>>) src(%arg3 : memref<8x8xf32, #tpu.memory_space<any>>) dst(%arg9 : memref<8x8xf32, #tpu.memory_space<vmem>>)
      %c1_i32 = arith.constant 1 : i32
      %25 = tpu.memref_slice %arg13[%c1_i32] : memref<4x!tpu.dma_semaphore, #tpu.memory_space<semaphore_mem>> -> memref<1x!tpu.dma_semaphore, #tpu.memory_space<semaphore_mem>>
      %26 = tpu.memref_squeeze %25 : memref<1x!tpu.dma_semaphore, #tpu.memory_space<semaphore_mem>> -> memref<!tpu.dma_semaphore, #tpu.memory_space<semaphore_mem>>
      tpu.wait_dma2 semaphore(%26 : memref<!tpu.dma_semaphore, #tpu.memory_space<semaphore_mem>>) src(%arg4 : memref<16x16xf32, #tpu.memory_space<any>>) dst(%arg10 : memref<16x16xf32, #tpu.memory_space<vmem>>)
      %c2_i32 = arith.constant 2 : i32
      %27 = tpu.memref_slice %arg13[%c2_i32] : memref<4x!tpu.dma_semaphore, #tpu.memory_space<semaphore_mem>> -> memref<1x!tpu.dma_semaphore, #tpu.memory_space<semaphore_mem>>
      %28 = tpu.memref_squeeze %27 : memref<1x!tpu.dma_semaphore, #tpu.memory_space<semaphore_mem>> -> memref<!tpu.dma_semaphore, #tpu.memory_space<semaphore_mem>>
      tpu.wait_dma2 semaphore(%28 : memref<!tpu.dma_semaphore, #tpu.memory_space<semaphore_mem>>) src(%arg5 : memref<8x4xf32, #tpu.memory_space<any>>) dst(%arg11 : memref<8x4xf32, #tpu.memory_space<vmem>>)
      %c3_i32 = arith.constant 3 : i32
      %29 = tpu.memref_slice %arg13[%c3_i32] : memref<4x!tpu.dma_semaphore, #tpu.memory_space<semaphore_mem>> -> memref<1x!tpu.dma_semaphore, #tpu.memory_space<semaphore_mem>>
      %30 = tpu.memref_squeeze %29 : memref<1x!tpu.dma_semaphore, #tpu.memory_space<semaphore_mem>> -> memref<!tpu.dma_semaphore, #tpu.memory_space<semaphore_mem>>
      tpu.wait_dma2 semaphore(%30 : memref<!tpu.dma_semaphore, #tpu.memory_space<semaphore_mem>>) src(%arg6 : memref<16x4xf32, #tpu.memory_space<any>>) dst(%arg12 : memref<16x4xf32, #tpu.memory_space<vmem>>)
      %c0_13 = arith.constant 0 : index
      %c0_14 = arith.constant 0 : index
      %31 = vector.load %arg12[%c0_13, %c0_14] : memref<16x4xf32, #tpu.memory_space<vmem>>, vector<16x4xf32>
      %c0_15 = arith.constant 0 : index
      %c0_16 = arith.constant 0 : index
      %32 = vector.load %arg10[%c0_15, %c0_16] : memref<16x16xf32, #tpu.memory_space<vmem>>, vector<16x16xf32>
      %cst_17 = arith.constant dense<0.000000e+00> : vector<16x4xf32>
      %33 = tpu.matmul %32, %31, %cst_17 {dimension_numbers = #tpu.dot_dimension_numbers<[1], [0], [0], [1], [0, 0, 1, 1], [], []>} : vector<16x16xf32>, vector<16x4xf32>, vector<16x4xf32> -> vector<16x4xf32>
      %34 = arith.mulf %33, %31 : vector<16x4xf32>
      %35 = vector.shape_cast %34 : vector<16x4xf32> to vector<1x16x4xf32>
      %cst_18 = arith.constant dense<0.000000e+00> : vector<1xf32>
      %36 = vector.multi_reduction <add>, %35, %cst_18 [1, 2] : vector<1x16x4xf32> to vector<1xf32>
      %37 = vector.shape_cast %36 : vector<1xf32> to vector<1x1x1xf32>
      %38 = vector.extract %37[0, 0, 0] : f32 from vector<1x1x1xf32>
      %c0_19 = arith.constant 0 : index
      %c0_20 = arith.constant 0 : index
      %39 = vector.load %arg11[%c0_19, %c0_20] : memref<8x4xf32, #tpu.memory_space<vmem>>, vector<8x4xf32>
      %c0_21 = arith.constant 0 : index
      %c0_22 = arith.constant 0 : index
      %40 = vector.load %arg9[%c0_21, %c0_22] : memref<8x8xf32, #tpu.memory_space<vmem>>, vector<8x8xf32>
      %cst_23 = arith.constant dense<0.000000e+00> : vector<8x4xf32>
      %41 = tpu.matmul %40, %39, %cst_23 {dimension_numbers = #tpu.dot_dimension_numbers<[1], [0], [0], [1], [0, 0, 1, 1], [], []>} : vector<8x8xf32>, vector<8x4xf32>, vector<8x4xf32> -> vector<8x4xf32>
      %42 = arith.mulf %41, %39 : vector<8x4xf32>
      %43 = vector.shape_cast %42 : vector<8x4xf32> to vector<1x8x4xf32>
      %cst_24 = arith.constant dense<0.000000e+00> : vector<1xf32>
      %44 = vector.multi_reduction <add>, %43, %cst_24 [1, 2] : vector<1x8x4xf32> to vector<1xf32>
      %45 = vector.shape_cast %44 : vector<1xf32> to vector<1x1x1xf32>
      %46 = vector.extract %45[0, 0, 0] : f32 from vector<1x1x1xf32>
      %cst_25 = arith.constant 5.000000e-01 : f32
      %47 = arith.mulf %cst_25, %38 : f32
      %cst_26 = arith.constant 3.000000e-01 : f32
      %48 = arith.mulf %cst_26, %46 : f32
      %49 = arith.addf %47, %48 : f32
      %c0_27 = arith.constant 0 : index
      %c0_28 = arith.constant 0 : index
      %50 = vector.load %arg8[%c0_27, %c0_28] : memref<8x8xf32, #tpu.memory_space<vmem>>, vector<8x8xf32>
      %51 = vector.shape_cast %50 : vector<8x8xf32> to vector<1x8x8xf32>
      %cst_29 = arith.constant dense<0.000000e+00> : vector<1xf32>
      %52 = vector.multi_reduction <add>, %51, %cst_29 [1, 2] : vector<1x8x8xf32> to vector<1xf32>
      %53 = vector.shape_cast %52 : vector<1xf32> to vector<1x1x1xf32>
      %54 = vector.extract %53[0, 0, 0] : f32 from vector<1x1x1xf32>
      %cst_30 = arith.constant 7.812500e-03 : f32
      %55 = arith.mulf %54, %cst_30 : f32
      %cst_31 = arith.constant 0.699999988 : f32
      %56 = arith.mulf %cst_31, %55 : f32
      %cst_32 = arith.constant 3.000000e-01 : f32
      %57 = arith.mulf %cst_32, %49 : f32
      %58 = arith.addf %56, %57 : f32
      %c0_33 = arith.constant 0 : index
      %59 = memref.load %arg7[%c0_33] : memref<1xf32, #tpu.memory_space<smem>>
      memref.store %58, %arg7[%c0_33] : memref<1xf32, #tpu.memory_space<smem>>
    } else {
    }
    return
  }
  func.func @transform_0(%arg0: i32) -> (i32, i32) {
    %c0_i32 = arith.constant 0 : i32
    %c0_i32_0 = arith.constant 0 : i32
    return %arg0, %c0_i32 : i32, i32
  }
  func.func @transform_1(%arg0: i32) -> (i32, i32) {
    %c0_i32 = arith.constant 0 : i32
    %c0_i32_0 = arith.constant 0 : i32
    return %arg0, %c0_i32 : i32, i32
  }
  func.func @transform_6(%arg0: i32) -> i32 {
    %c0_i32 = arith.constant 0 : i32
    %c0_i32_0 = arith.constant 0 : i32
    return %c0_i32 : i32
  }
}

</mosaic_0001>

<llo_original>
// kernel: tpu_custom_call.1
$region0: #{tpu_custom_call.1}
  #allocation0 [shape = 'u32[]', space=smem, size = 0x4, offset = 0x4, fixed_abs, tag = 'smem constant byte address 0x4 - core index']
  #allocation1 [shape = 'u32[144,128]{1,0:T(1,128)}', space=vmem, size = 0x12000, scoped, tag = 'internal scratch']
  #allocation2 [shape = 'f32[8,8]{1,0:T(8,128)}', space=vmem, size = 0x1000, scoped, tag = 'scratch operand']
  #allocation3 [shape = 'f32[8,8]{1,0:T(8,128)}', space=vmem, size = 0x1000, scoped, tag = 'scratch operand']
  #allocation4 [shape = 'f32[16,16]{1,0:T(8,128)}', space=vmem, size = 0x2000, scoped, tag = 'scratch operand']
  #allocation5 [shape = 'f32[8,4]{1,0:T(8,128)}', space=vmem, size = 0x1000, scoped, tag = 'scratch operand']
  #allocation6 [shape = 'f32[16,4]{1,0:T(8,128)}', space=vmem, size = 0x2000, scoped, tag = 'scratch operand']
  #allocation7 [shape = 's32[4]{0}', space=sflag, size = 0x10, scoped, tag = 'scratch operand']
  #allocation10 [shape = 's32[]', space=sflag, size = 0x4, offset = 0, fixed_abs, tag = 'sflag constant byte address 0x0 - dummy sync flag']
  #allocation11 [shape = 's32[]', space=sflag, size = 0x4, offset = 0, fixed_abs, tag = 'sflag constant byte address 0x0 - dummy sync flag']
  #allocation12 [shape = 's32[]', space=sflag, size = 0x4, offset = 0, fixed_abs, tag = 'sflag constant byte address 0x0 - dummy sync flag']
  #allocation13 [shape = 's32[]', space=sflag, size = 0x4, offset = 0, fixed_abs, tag = 'sflag constant byte address 0x0 - dummy sync flag']
  %s0 = inlined_call_operand.vmem [shape: f32[16,8], index: 0, kind: input, shape index: {}]
  %s1 = inlined_call_operand.vmem [shape: f32[16,8], index: 1, kind: input, shape index: {}]
  %s2 = inlined_call_operand.vmem [shape: f32[8,8], index: 2, kind: input, shape index: {}]
  %s3 = inlined_call_operand.vmem [shape: f32[16,16], index: 3, kind: input, shape index: {}]
  %s4 = inlined_call_operand.vmem [shape: f32[8,4], index: 4, kind: input, shape index: {}]
  %s5 = inlined_call_operand.vmem [shape: f32[16,4], index: 5, kind: input, shape index: {}]
  %s6 = inlined_call_operand.hbm [shape: f32[1], index: 6, kind: output, shape index: {}]
  %s7 = sld [smem:[#allocation0]]
  $region162: #{tpu_custom_call.1} parent=0
    _
  %s9 = ssub.s32 1, %s7
  %s10 = scalar_select 0, %s9, %s7
  $region1: #{tpu_custom_call.1} parent=0
    #allocation8 [shape = 'u8[512]{0}', space=smem, size = 0x200, scoped, tag = 'output window, operand 0, single buffered']
    #allocation9 [shape = 's32[1]{0}', space=sflag, size = 0x4, scoped, tag = 'scoped memory for tpu_custom_call.1']
    %11 = vsyncpa [#allocation9], 0
    // Predicated region
    $region2: #{tpu_custom_call.1} parent=1 // pred_check
      _
    $region3: #{tpu_custom_call.1} parent=1 // pred_check_branch
      %13 = sbr.rel (0) target = $region5
    $region4: #{tpu_custom_call.1} parent=1 // pred_region
      _
    $region5: #{tpu_custom_call.1} parent=1 // pred_fallthru
      _
    // Predicated region
    $region6: #{tpu_custom_call.1} parent=1 // pred_check
      _
    $region7: #{tpu_custom_call.1} parent=1 // pred_check_branch
      %15 = sbr.rel (0) target = $region9
    $region8: #{tpu_custom_call.1} parent=1 // pred_region
      _
    $region9: #{tpu_custom_call.1} parent=1 // pred_fallthru
      _
    %p16 = scmp.eq.s32.totalorder 0, 0
    // Predicated region
    $region10: #{tpu_custom_call.1} parent=1 // pred_check
      %p17 = pneg %p16
    $region11: #{tpu_custom_call.1} parent=1 // pred_check_branch
      %19 = sbr.rel (%p17) target = $region13
    $region12: #{tpu_custom_call.1} parent=1 // pred_region
      %vm20 = vcmask 64512
      %21 = vst.msk [vmem:[#allocation2] sm:$0xff] %vm20, 0.0
      %p23 = scmp.lt.u32.totalorder 8, 8
      %p24 = pneg %p23
      // Predicated region
      $region14: #{tpu_custom_call.1} parent=12 // pred_check
        _
      $region15: #{tpu_custom_call.1} parent=12 // pred_check_branch
        %26 = sbr.rel (%p23) target = $region17
      $region16: #{tpu_custom_call.1} parent=12 // pred_region
        %s41 = sand.u32 8, 7
        %p42 = scmp.eq.s32.totalorder %s41, 0
        // Predicated region
        $region29: #{tpu_custom_call.1} parent=16 // pred_check
          %p43 = pneg %p42
        $region30: #{tpu_custom_call.1} parent=16 // pred_check_branch
          %45 = sbr.rel (%p43) target = $region32
        $region31: #{tpu_custom_call.1} parent=16 // pred_region
          loop: start=0, step=1, limit=1
          $region33: #{tpu_custom_call.1} parent=31 // loop_pre_header
            _
          $region34: #{tpu_custom_call.1} parent=31 // loop_header
            %s47 = sphi 0, %s51
            %p48 = scmp.ge.s32.totalorder %s47, 1
            %s52 = sphi %s2, %s2
            %s53 = sphi [#allocation3], [#allocation3]
          $region35: #{tpu_custom_call.1} parent=31 // loop_header_branch
            %50 = sbr.rel (%p48) target = $region39
          $region36: #{tpu_custom_call.1} parent=31 // loop_body
            %v54 = vld [vmem:[%s52] sm:$0xff]
            %55 = vst [vmem:[%s53] sm:$0xff] %v54
          $region37: #{tpu_custom_call.1} parent=31 // loop_footer
            %s51 = sadd.s32 1, %s47
          $region38: #{tpu_custom_call.1} parent=31 // loop_footer_branch
            %46 = sbr.rel target = $region34
          $region39: #{tpu_custom_call.1} parent=31 // loop_exit
            _
        $region32: #{tpu_custom_call.1} parent=16 // pred_fallthru
          _
        %p56 = pneg %p42
        // Predicated region
        $region40: #{tpu_custom_call.1} parent=16 // pred_check
          _
        $region41: #{tpu_custom_call.1} parent=16 // pred_check_branch
          %58 = sbr.rel (%p42) target = $region43
        $region42: #{tpu_custom_call.1} parent=16 // pred_region
          %s59 = sand.u32 8, 7
        $region43: #{tpu_custom_call.1} parent=16 // pred_fallthru
          _
      $region17: #{tpu_custom_call.1} parent=12 // pred_fallthru
        _
      // Predicated region
      $region18: #{tpu_custom_call.1} parent=12 // pred_check
        %p27 = pneg %p23
      $region19: #{tpu_custom_call.1} parent=12 // pred_check_branch
        %29 = sbr.rel (%p27) target = $region21
      $region20: #{tpu_custom_call.1} parent=12 // pred_region
        %s30 = sshllo.u32 0, 8
        loop: start=0, step=1, limit=1
        $region22: #{tpu_custom_call.1} parent=20 // loop_pre_header
          _
        $region23: #{tpu_custom_call.1} parent=20 // loop_header
          %s32 = sphi 0, %s36
          %p33 = scmp.ge.s32.totalorder %s32, 1
          %s37 = sphi %s2, %s2
          %s38 = sphi [#allocation3], [#allocation3]
        $region24: #{tpu_custom_call.1} parent=20 // loop_header_branch
          %35 = sbr.rel (%p33) target = $region28
        $region25: #{tpu_custom_call.1} parent=20 // loop_body
          %v39 = vld [vmem:[%s37] sm:%s30]
          %40 = vst [vmem:[%s38] sm:%s30] %v39
        $region26: #{tpu_custom_call.1} parent=20 // loop_footer
          %s36 = sadd.s32 1, %s32
        $region27: #{tpu_custom_call.1} parent=20 // loop_footer_branch
          %31 = sbr.rel target = $region23
        $region28: #{tpu_custom_call.1} parent=20 // loop_exit
          _
      $region21: #{tpu_custom_call.1} parent=12 // pred_fallthru
        _
      // Predicated region
      $region44: #{tpu_custom_call.1} parent=12 // pred_check
        _
      $region45: #{tpu_custom_call.1} parent=12 // pred_check_branch
        %62 = sbr.rel (0) target = $region47
      $region46: #{tpu_custom_call.1} parent=12 // pred_region
        %63 = vsyncadd [#allocation7], 128
      $region47: #{tpu_custom_call.1} parent=12 // pred_fallthru
        _
      %s64 = scalar_lea.sflag [#allocation7], 1
      %p66 = scmp.lt.u32.totalorder 16, 8
      %p67 = pneg %p66
      // Predicated region
      $region48: #{tpu_custom_call.1} parent=12 // pred_check
        _
      $region49: #{tpu_custom_call.1} parent=12 // pred_check_branch
        %69 = sbr.rel (%p66) target = $region51
      $region50: #{tpu_custom_call.1} parent=12 // pred_region
        %s84 = sand.u32 16, 7
        %p85 = scmp.eq.s32.totalorder %s84, 0
        // Predicated region
        $region63: #{tpu_custom_call.1} parent=50 // pred_check
          %p86 = pneg %p85
        $region64: #{tpu_custom_call.1} parent=50 // pred_check_branch
          %88 = sbr.rel (%p86) target = $region66
        $region65: #{tpu_custom_call.1} parent=50 // pred_region
          loop: start=0, step=1, limit=1
          $region67: #{tpu_custom_call.1} parent=65 // loop_pre_header
            _
          $region68: #{tpu_custom_call.1} parent=65 // loop_header
            %s90 = sphi 0, %s94
            %p91 = scmp.ge.s32.totalorder %s90, 1
            %s95 = sphi %s3, %s3
            %s96 = sphi [#allocation4], [#allocation4]
          $region69: #{tpu_custom_call.1} parent=65 // loop_header_branch
            %93 = sbr.rel (%p91) target = $region73
          $region70: #{tpu_custom_call.1} parent=65 // loop_body
            %v97 = vld [vmem:[%s95] sm:$0xff]
            %98 = vst [vmem:[%s96] sm:$0xff] %v97
            %v99 = vld [vmem:[%s95 + $0x8] sm:$0xff]
            %100 = vst [vmem:[%s96 + $0x8] sm:$0xff] %v99
          $region71: #{tpu_custom_call.1} parent=65 // loop_footer
            %s94 = sadd.s32 1, %s90
          $region72: #{tpu_custom_call.1} parent=65 // loop_footer_branch
            %89 = sbr.rel target = $region68
          $region73: #{tpu_custom_call.1} parent=65 // loop_exit
            _
        $region66: #{tpu_custom_call.1} parent=50 // pred_fallthru
          _
        %p101 = pneg %p85
        // Predicated region
        $region74: #{tpu_custom_call.1} parent=50 // pred_check
          _
        $region75: #{tpu_custom_call.1} parent=50 // pred_check_branch
          %103 = sbr.rel (%p85) target = $region77
        $region76: #{tpu_custom_call.1} parent=50 // pred_region
          %s104 = sand.u32 16, 7
        $region77: #{tpu_custom_call.1} parent=50 // pred_fallthru
          _
      $region51: #{tpu_custom_call.1} parent=12 // pred_fallthru
        _
      // Predicated region
      $region52: #{tpu_custom_call.1} parent=12 // pred_check
        %p70 = pneg %p66
      $region53: #{tpu_custom_call.1} parent=12 // pred_check_branch
        %72 = sbr.rel (%p70) target = $region55
      $region54: #{tpu_custom_call.1} parent=12 // pred_region
        %s73 = sshllo.u32 0, 16
        loop: start=0, step=1, limit=1
        $region56: #{tpu_custom_call.1} parent=54 // loop_pre_header
          _
        $region57: #{tpu_custom_call.1} parent=54 // loop_header
          %s75 = sphi 0, %s79
          %p76 = scmp.ge.s32.totalorder %s75, 1
          %s80 = sphi %s3, %s3
          %s81 = sphi [#allocation4], [#allocation4]
        $region58: #{tpu_custom_call.1} parent=54 // loop_header_branch
          %78 = sbr.rel (%p76) target = $region62
        $region59: #{tpu_custom_call.1} parent=54 // loop_body
          %v82 = vld [vmem:[%s80] sm:%s73]
          %83 = vst [vmem:[%s81] sm:%s73] %v82
        $region60: #{tpu_custom_call.1} parent=54 // loop_footer
          %s79 = sadd.s32 1, %s75
        $region61: #{tpu_custom_call.1} parent=54 // loop_footer_branch
          %74 = sbr.rel target = $region57
        $region62: #{tpu_custom_call.1} parent=54 // loop_exit
          _
      $region55: #{tpu_custom_call.1} parent=12 // pred_fallthru
        _
      // Predicated region
      $region78: #{tpu_custom_call.1} parent=12 // pred_check
        _
      $region79: #{tpu_custom_call.1} parent=12 // pred_check_branch
        %107 = sbr.rel (0) target = $region81
      $region80: #{tpu_custom_call.1} parent=12 // pred_region
        %108 = vsyncadd %s64, 256
      $region81: #{tpu_custom_call.1} parent=12 // pred_fallthru
        _
      %s109 = scalar_lea.sflag [#allocation7], 2
      %p111 = scmp.lt.u32.totalorder 8, 8
      %p112 = pneg %p111
      // Predicated region
      $region82: #{tpu_custom_call.1} parent=12 // pred_check
        _
      $region83: #{tpu_custom_call.1} parent=12 // pred_check_branch
        %114 = sbr.rel (%p111) target = $region85
      $region84: #{tpu_custom_call.1} parent=12 // pred_region
        %s129 = sand.u32 8, 7
        %p130 = scmp.eq.s32.totalorder %s129, 0
        // Predicated region
        $region97: #{tpu_custom_call.1} parent=84 // pred_check
          %p131 = pneg %p130
        $region98: #{tpu_custom_call.1} parent=84 // pred_check_branch
          %133 = sbr.rel (%p131) target = $region100
        $region99: #{tpu_custom_call.1} parent=84 // pred_region
          loop: start=0, step=1, limit=1
          $region101: #{tpu_custom_call.1} parent=99 // loop_pre_header
            _
          $region102: #{tpu_custom_call.1} parent=99 // loop_header
            %s135 = sphi 0, %s139
            %p136 = scmp.ge.s32.totalorder %s135, 1
            %s140 = sphi %s4, %s4
            %s141 = sphi [#allocation5], [#allocation5]
          $region103: #{tpu_custom_call.1} parent=99 // loop_header_branch
            %138 = sbr.rel (%p136) target = $region107
          $region104: #{tpu_custom_call.1} parent=99 // loop_body
            %v142 = vld [vmem:[%s140] sm:$0xff]
            %143 = vst [vmem:[%s141] sm:$0xff] %v142
          $region105: #{tpu_custom_call.1} parent=99 // loop_footer
            %s139 = sadd.s32 1, %s135
          $region106: #{tpu_custom_call.1} parent=99 // loop_footer_branch
            %134 = sbr.rel target = $region102
          $region107: #{tpu_custom_call.1} parent=99 // loop_exit
            _
        $region100: #{tpu_custom_call.1} parent=84 // pred_fallthru
          _
        %p144 = pneg %p130
        // Predicated region
        $region108: #{tpu_custom_call.1} parent=84 // pred_check
          _
        $region109: #{tpu_custom_call.1} parent=84 // pred_check_branch
          %146 = sbr.rel (%p130) target = $region111
        $region110: #{tpu_custom_call.1} parent=84 // pred_region
          %s147 = sand.u32 8, 7
        $region111: #{tpu_custom_call.1} parent=84 // pred_fallthru
          _
      $region85: #{tpu_custom_call.1} parent=12 // pred_fallthru
        _
      // Predicated region
      $region86: #{tpu_custom_call.1} parent=12 // pred_check
        %p115 = pneg %p111
      $region87: #{tpu_custom_call.1} parent=12 // pred_check_branch
        %117 = sbr.rel (%p115) target = $region89
      $region88: #{tpu_custom_call.1} parent=12 // pred_region
        %s118 = sshllo.u32 0, 8
        loop: start=0, step=1, limit=1
        $region90: #{tpu_custom_call.1} parent=88 // loop_pre_header
          _
        $region91: #{tpu_custom_call.1} parent=88 // loop_header
          %s120 = sphi 0, %s124
          %p121 = scmp.ge.s32.totalorder %s120, 1
          %s125 = sphi %s4, %s4
          %s126 = sphi [#allocation5], [#allocation5]
        $region92: #{tpu_custom_call.1} parent=88 // loop_header_branch
          %123 = sbr.rel (%p121) target = $region96
        $region93: #{tpu_custom_call.1} parent=88 // loop_body
          %v127 = vld [vmem:[%s125] sm:%s118]
          %128 = vst [vmem:[%s126] sm:%s118] %v127
        $region94: #{tpu_custom_call.1} parent=88 // loop_footer
          %s124 = sadd.s32 1, %s120
        $region95: #{tpu_custom_call.1} parent=88 // loop_footer_branch
          %119 = sbr.rel target = $region91
        $region96: #{tpu_custom_call.1} parent=88 // loop_exit
          _
      $region89: #{tpu_custom_call.1} parent=12 // pred_fallthru
        _
      // Predicated region
      $region112: #{tpu_custom_call.1} parent=12 // pred_check
        _
      $region113: #{tpu_custom_call.1} parent=12 // pred_check_branch
        %150 = sbr.rel (0) target = $region115
      $region114: #{tpu_custom_call.1} parent=12 // pred_region
        %151 = vsyncadd %s109, 128
      $region115: #{tpu_custom_call.1} parent=12 // pred_fallthru
        _
      %s152 = scalar_lea.sflag [#allocation7], 3
      %p154 = scmp.lt.u32.totalorder 16, 8
      %p155 = pneg %p154
      // Predicated region
      $region116: #{tpu_custom_call.1} parent=12 // pred_check
        _
      $region117: #{tpu_custom_call.1} parent=12 // pred_check_branch
        %157 = sbr.rel (%p154) target = $region119
      $region118: #{tpu_custom_call.1} parent=12 // pred_region
        %s172 = sand.u32 16, 7
        %p173 = scmp.eq.s32.totalorder %s172, 0
        // Predicated region
        $region131: #{tpu_custom_call.1} parent=118 // pred_check
          %p174 = pneg %p173
        $region132: #{tpu_custom_call.1} parent=118 // pred_check_branch
          %176 = sbr.rel (%p174) target = $region134
        $region133: #{tpu_custom_call.1} parent=118 // pred_region
          loop: start=0, step=1, limit=1
          $region135: #{tpu_custom_call.1} parent=133 // loop_pre_header
            _
          $region136: #{tpu_custom_call.1} parent=133 // loop_header
            %s178 = sphi 0, %s182
            %p179 = scmp.ge.s32.totalorder %s178, 1
            %s183 = sphi %s5, %s5
            %s184 = sphi [#allocation6], [#allocation6]
          $region137: #{tpu_custom_call.1} parent=133 // loop_header_branch
            %181 = sbr.rel (%p179) target = $region141
          $region138: #{tpu_custom_call.1} parent=133 // loop_body
            %v185 = vld [vmem:[%s183] sm:$0xff]
            %186 = vst [vmem:[%s184] sm:$0xff] %v185
            %v187 = vld [vmem:[%s183 + $0x8] sm:$0xff]
            %188 = vst [vmem:[%s184 + $0x8] sm:$0xff] %v187
          $region139: #{tpu_custom_call.1} parent=133 // loop_footer
            %s182 = sadd.s32 1, %s178
          $region140: #{tpu_custom_call.1} parent=133 // loop_footer_branch
            %177 = sbr.rel target = $region136
          $region141: #{tpu_custom_call.1} parent=133 // loop_exit
            _
        $region134: #{tpu_custom_call.1} parent=118 // pred_fallthru
          _
        %p189 = pneg %p173
        // Predicated region
        $region142: #{tpu_custom_call.1} parent=118 // pred_check
          _
        $region143: #{tpu_custom_call.1} parent=118 // pred_check_branch
          %191 = sbr.rel (%p173) target = $region145
        $region144: #{tpu_custom_call.1} parent=118 // pred_region
          %s192 = sand.u32 16, 7
        $region145: #{tpu_custom_call.1} parent=118 // pred_fallthru
          _
      $region119: #{tpu_custom_call.1} parent=12 // pred_fallthru
        _
      // Predicated region
      $region120: #{tpu_custom_call.1} parent=12 // pred_check
        %p158 = pneg %p154
      $region121: #{tpu_custom_call.1} parent=12 // pred_check_branch
        %160 = sbr.rel (%p158) target = $region123
      $region122: #{tpu_custom_call.1} parent=12 // pred_region
        %s161 = sshllo.u32 0, 16
        loop: start=0, step=1, limit=1
        $region124: #{tpu_custom_call.1} parent=122 // loop_pre_header
          _
        $region125: #{tpu_custom_call.1} parent=122 // loop_header
          %s163 = sphi 0, %s167
          %p164 = scmp.ge.s32.totalorder %s163, 1
          %s168 = sphi %s5, %s5
          %s169 = sphi [#allocation6], [#allocation6]
        $region126: #{tpu_custom_call.1} parent=122 // loop_header_branch
          %166 = sbr.rel (%p164) target = $region130
        $region127: #{tpu_custom_call.1} parent=122 // loop_body
          %v170 = vld [vmem:[%s168] sm:%s161]
          %171 = vst [vmem:[%s169] sm:%s161] %v170
        $region128: #{tpu_custom_call.1} parent=122 // loop_footer
          %s167 = sadd.s32 1, %s163
        $region129: #{tpu_custom_call.1} parent=122 // loop_footer_branch
          %162 = sbr.rel target = $region125
        $region130: #{tpu_custom_call.1} parent=122 // loop_exit
          _
      $region123: #{tpu_custom_call.1} parent=12 // pred_fallthru
        _
      // Predicated region
      $region146: #{tpu_custom_call.1} parent=12 // pred_check
        _
      $region147: #{tpu_custom_call.1} parent=12 // pred_check_branch
        %195 = sbr.rel (0) target = $region149
      $region148: #{tpu_custom_call.1} parent=12 // pred_region
        %196 = vsyncadd %s152, 256
      $region149: #{tpu_custom_call.1} parent=12 // pred_fallthru
        _
    $region13: #{tpu_custom_call.1} parent=1 // pred_fallthru
      _
    %v197 = vld [vmem:[%s1] sm:$0xff]
    %v198 = vld [vmem:[%s1 + $0x8] sm:$0xff]
    %v199 = vld [vmem:[%s0] sm:$0xff]
    %v200 = vld [vmem:[%s0 + $0x8] sm:$0xff]
    %v201 = vmax.f32 %v197, 0.0
    %v202 = vmax.f32 %v198, 0.0
    %v203 = vmul.f32 %v197, %v199
    %v204 = vmul.f32 %v198, %v200
    %v205 = vsub.f32 %v201, %v203
    %v206 = vsub.f32 %v202, %v204
    %v207 = vand.u32 2147483647, %v197
    %v208 = vand.u32 2147483647, %v198
    %v209 = vsub.f32 0.0, %v207
    %v210 = vsub.f32 0.0, %v208
    %v211 = vmul.f32 %v209, 1.442695
    %v212 = vpow.pop %v211
    %v213 = vmul.f32 %v210, 1.442695
    %v214 = vpow.pop %v213
    %v215 = vadd.f32 %v212, 1.0
    %v216 = vlog2.pop %v215
    %v217 = vmul.f32 %v216, 0.6931472
    %v218 = vmul.f32 -0.5, %v212
    %v219 = vadd.f32 %v218, 1.0
    %v220 = vmul.f32 %v219, %v212
    %v221 = vand.u32 2147483647, %v212
    %vm222 = vcmp.lt.f32.partialorder %v221, 0.0004427343
    %v223 = vsel %vm222, %v220, %v217
    %v224 = vadd.f32 %v214, 1.0
    %v225 = vlog2.pop %v224
    %v226 = vmul.f32 %v225, 0.6931472
    %v227 = vmul.f32 -0.5, %v214
    %v228 = vadd.f32 %v227, 1.0
    %v229 = vmul.f32 %v228, %v214
    %v230 = vand.u32 2147483647, %v214
    %vm231 = vcmp.lt.f32.partialorder %v230, 0.0004427343
    %v232 = vsel %vm231, %v229, %v226
    %v233 = vadd.f32 %v205, %v223
    %v234 = vadd.f32 %v206, %v232
    %v235 = vld [vmem:[#allocation2] sm:$0xff]
    %vm236 = vcmask 64512
    %v237 = vsel %vm236, %v233, 0.0
    %v238 = vsel %vm236, %v234, 0.0
    %v239 = vadd.f32 %v237, %v238
    %v240 = vadd.f32 %v235, %v239
    %241 = vst.msk [vmem:[#allocation2] sm:$0xff] %vm236, %v240
    // Predicated region
    $region150: #{tpu_custom_call.1} parent=1 // pred_check
      %p242 = pneg %p16
    $region151: #{tpu_custom_call.1} parent=1 // pred_check_branch
      %244 = sbr.rel (%p242) target = $region153
    $region152: #{tpu_custom_call.1} parent=1 // pred_region
      %s245 = smul.u32 8, 1
      %s246 = sshll.u32 %s245, 4
      %247 = dma.done [#allocation7], %s246
      %s248 = scalar_lea.sflag [#allocation7], 1
      %s249 = smul.u32 16, 1
      %s250 = sshll.u32 %s249, 4
      %251 = dma.done %s248, %s250
      %s252 = scalar_lea.sflag [#allocation7], 2
      %s253 = sshll.u32 %s245, 4
      %254 = dma.done %s252, %s253
      %s255 = scalar_lea.sflag [#allocation7], 3
      %s256 = sshll.u32 %s249, 4
      %257 = dma.done %s255, %s256
      %v258 = vld [vmem:[#allocation6] sm:$0xff]
      %v259 = vld [vmem:[#allocation6 + $0x8] sm:$0xff]
      %v260 = vld [vmem:[#allocation4] sm:$0xff]
      %v261 = vld [vmem:[#allocation4 + $0x8] sm:$0xff]
      %vm262 = vcmask 130048
      %v264 = vsel %vm262, %v260, 0
      %v267 = vsel %vm262, %v261, 0
      %269 = vmatprep.subr.mxu0 0.0
      %270 = vmatpush1.msra.mxu0 %v258
      %271 = vmatprep.subr.mxu0 0.0
      %272 = vmatpush1.msra.mxu0 %v259
      %273 = vmatprep.subr.mxu0 0.0
      %274 = vmatpush1.msra.mxu0 0.0
      %275 = vmatprep.subr.mxu0 0.0
      %276 = vmatpush1.msra.mxu0 0.0
      %277 = vmatprep.subr.mxu0 0.0
      %278 = vmatpush1.msra.mxu0 0.0
      %279 = vmatprep.subr.mxu0 0.0
      %280 = vmatpush1.msra.mxu0 0.0
      %281 = vmatprep.subr.mxu0 0.0
      %282 = vmatpush1.msra.mxu0 0.0
      %283 = vmatprep.subr.mxu0 0.0
      %284 = vmatpush1.msra.mxu0 0.0
      %285 = vmatprep.subr.mxu0 0.0
      %286 = vmatpush1.msra.mxu0 0.0
      %287 = vmatprep.subr.mxu0 0.0
      %288 = vmatpush1.msra.mxu0 0.0
      %289 = vmatprep.subr.mxu0 0.0
      %290 = vmatpush1.msra.mxu0 0.0
      %291 = vmatprep.subr.mxu0 0.0
      %292 = vmatpush1.msra.mxu0 0.0
      %293 = vmatprep.subr.mxu0 0.0
      %294 = vmatpush1.msra.mxu0 0.0
      %295 = vmatprep.subr.mxu0 0.0
      %296 = vmatpush1.msra.mxu0 0.0
      %297 = vmatprep.subr.mxu0 0.0
      %298 = vmatpush1.msra.mxu0 0.0
      %299 = vmatprep.subr.mxu0 0.0
      %300 = vmatpush1.msra.mxu0 0.0
      %301 = vmatprep.subr.mxu0 0.0
      %302 = vmatpush1.msra.mxu0 0.0
      %303 = vmatprep.subr.mxu0 0.0
      %304 = vmatpush1.msra.mxu0 0.0
      %305 = vmatprep.subr.mxu0 0.0
      %306 = vmatpush1.msra.mxu0 0.0
      %307 = vmatprep.subr.mxu0 0.0
      %308 = vmatpush1.msra.mxu0 0.0
      %309 = vmatprep.subr.mxu0 0.0
      %310 = vmatpush1.msra.mxu0 0.0
      %311 = vmatprep.subr.mxu0 0.0
      %312 = vmatpush1.msra.mxu0 0.0
      %313 = vmatprep.subr.mxu0 0.0
      %314 = vmatpush1.msra.mxu0 0.0
      %315 = vmatprep.subr.mxu0 0.0
      %316 = vmatpush1.msra.mxu0 0.0
      %317 = vmatprep.subr.mxu0 0.0
      %318 = vmatpush1.msra.mxu0 0.0
      %319 = vmatprep.subr.mxu0 0.0
      %320 = vmatpush1.msra.mxu0 0.0
      %321 = vmatprep.subr.mxu0 0.0
      %322 = vmatpush1.msra.mxu0 0.0
      %323 = vmatprep.subr.mxu0 0.0
      %324 = vmatpush1.msra.mxu0 0.0
      %325 = vmatprep.subr.mxu0 0.0
      %326 = vmatpush1.msra.mxu0 0.0
      %327 = vmatprep.subr.mxu0 0.0
      %328 = vmatpush1.msra.mxu0 0.0
      %329 = vmatprep.subr.mxu0 0.0
      %330 = vmatpush1.msra.mxu0 0.0
      %331 = vmatprep.subr.mxu0 0.0
      %332 = vmatpush1.msra.mxu0 0.0
      %333 = vmatprep.mubr.f32.mxu0 0.0
      %334 = vmatmul.mubr.f32.gmra.mrb[0].mxu0 %v264
      %v335 = vpop.f32.mrb[0].mxu0
      %v336 = vadd.f32 0.0, %v335
      %v337 = vpop.f32.mrb[0].mxu0
      %338 = vmatprep.mubr.f32.mxu0 0.0
      %339 = vmatmul.mubr.f32.gmra.mrb[0].mxu0 %v267
      %v340 = vpop.f32.mrb[0].mxu0
      %v341 = vadd.f32 0.0, %v340
      %v342 = vpop.f32.mrb[0].mxu0
      %343 = vdwg.mxu0
      %v344 = vmul.f32 %v336, %v258
      %v345 = vmul.f32 %v341, %v259
      %vm346 = vcmask 31744
      %v347 = vsel %vm346, %v344, 0.0
      %v348 = vsel %vm346, %v345, 0.0
      %v349 = vadd.f32 %v347, %v348
      %350 = vadd.xlane.f32.xlu0 %v349
      %v351 = vpop.xlane.xlu0 %350
      %v352 = vrot.slane %v351, 4
      %v353 = vadd.f32 %v351, %v352
      %v354 = vrot.slane %v353, 2
      %v355 = vadd.f32 %v353, %v354
      %v356 = vrot.slane %v355, 1
      %v357 = vadd.f32 %v355, %v356
      %s358 = vtos %v357
      %v359 = vld [vmem:[#allocation5] sm:$0xff]
      %v360 = vld [vmem:[#allocation3] sm:$0xff]
      %v362 = vsel %vm236, %v360, 0
      %364 = vmatprep.subr.mxu0 0.0
      %365 = vmatpush1.msra.mxu0 %v359
      %366 = vmatprep.subr.mxu0 0.0
      %367 = vmatpush1.msra.mxu0 0.0
      %368 = vmatprep.subr.mxu0 0.0
      %369 = vmatpush1.msra.mxu0 0.0
      %370 = vmatprep.subr.mxu0 0.0
      %371 = vmatpush1.msra.mxu0 0.0
      %372 = vmatprep.subr.mxu0 0.0
      %373 = vmatpush1.msra.mxu0 0.0
      %374 = vmatprep.subr.mxu0 0.0
      %375 = vmatpush1.msra.mxu0 0.0
      %376 = vmatprep.subr.mxu0 0.0
      %377 = vmatpush1.msra.mxu0 0.0
      %378 = vmatprep.subr.mxu0 0.0
      %379 = vmatpush1.msra.mxu0 0.0
      %380 = vmatprep.subr.mxu0 0.0
      %381 = vmatpush1.msra.mxu0 0.0
      %382 = vmatprep.subr.mxu0 0.0
      %383 = vmatpush1.msra.mxu0 0.0
      %384 = vmatprep.subr.mxu0 0.0
      %385 = vmatpush1.msra.mxu0 0.0
      %386 = vmatprep.subr.mxu0 0.0
      %387 = vmatpush1.msra.mxu0 0.0
      %388 = vmatprep.subr.mxu0 0.0
      %389 = vmatpush1.msra.mxu0 0.0
      %390 = vmatprep.subr.mxu0 0.0
      %391 = vmatpush1.msra.mxu0 0.0
      %392 = vmatprep.subr.mxu0 0.0
      %393 = vmatpush1.msra.mxu0 0.0
      %394 = vmatprep.subr.mxu0 0.0
      %395 = vmatpush1.msra.mxu0 0.0
      %396 = vmatprep.subr.mxu0 0.0
      %397 = vmatpush1.msra.mxu0 0.0
      %398 = vmatprep.subr.mxu0 0.0
      %399 = vmatpush1.msra.mxu0 0.0
      %400 = vmatprep.subr.mxu0 0.0
      %401 = vmatpush1.msra.mxu0 0.0
      %402 = vmatprep.subr.mxu0 0.0
      %403 = vmatpush1.msra.mxu0 0.0
      %404 = vmatprep.subr.mxu0 0.0
      %405 = vmatpush1.msra.mxu0 0.0
      %406 = vmatprep.subr.mxu0 0.0
      %407 = vmatpush1.msra.mxu0 0.0
      %408 = vmatprep.subr.mxu0 0.0
      %409 = vmatpush1.msra.mxu0 0.0
      %410 = vmatprep.subr.mxu0 0.0
      %411 = vmatpush1.msra.mxu0 0.0
      %412 = vmatprep.subr.mxu0 0.0
      %413 = vmatpush1.msra.mxu0 0.0
      %414 = vmatprep.subr.mxu0 0.0
      %415 = vmatpush1.msra.mxu0 0.0
      %416 = vmatprep.subr.mxu0 0.0
      %417 = vmatpush1.msra.mxu0 0.0
      %418 = vmatprep.subr.mxu0 0.0
      %419 = vmatpush1.msra.mxu0 0.0
      %420 = vmatprep.subr.mxu0 0.0
      %421 = vmatpush1.msra.mxu0 0.0
      %422 = vmatprep.subr.mxu0 0.0
      %423 = vmatpush1.msra.mxu0 0.0
      %424 = vmatprep.subr.mxu0 0.0
      %425 = vmatpush1.msra.mxu0 0.0
      %426 = vmatprep.subr.mxu0 0.0
      %427 = vmatpush1.msra.mxu0 0.0
      %428 = vmatprep.mubr.f32.mxu0 0.0
      %429 = vmatmul.mubr.f32.gmra.mrb[0].mxu0 %v362
      %v430 = vpop.f32.mrb[0].mxu0
      %v431 = vadd.f32 0.0, %v430
      %v432 = vpop.f32.mrb[0].mxu0
      %433 = vdwg.mxu0
      %v434 = vmul.f32 %v431, %v359
      %v435 = vsel %vm346, %v434, 0.0
      %436 = vadd.xlane.f32.xlu0 %v435
      %v437 = vpop.xlane.xlu0 %436
      %v438 = vrot.slane %v437, 4
      %v439 = vadd.f32 %v437, %v438
      %v440 = vrot.slane %v439, 2
      %v441 = vadd.f32 %v439, %v440
      %v442 = vrot.slane %v441, 1
      %v443 = vadd.f32 %v441, %v442
      %s444 = vtos %v443
      %s445 = smul.f32 %s358, 0.5
      %s446 = smul.f32 %s444, 0.3
      %s447 = sadd.f32 %s445, %s446
      %v448 = vld [vmem:[#allocation2] sm:$0xff]
      %v449 = vsel %vm236, %v448, 0.0
      %450 = vadd.xlane.f32.xlu0 %v449
      %v451 = vpop.xlane.xlu0 %450
      %v452 = vrot.slane %v451, 4
      %v453 = vadd.f32 %v451, %v452
      %v454 = vrot.slane %v453, 2
      %v455 = vadd.f32 %v453, %v454
      %v456 = vrot.slane %v455, 1
      %v457 = vadd.f32 %v455, %v456
      %s458 = vtos %v457
      %s459 = smul.f32 %s458, 0.0078125
      %s460 = smul.f32 %s459, 0.7
      %s461 = smul.f32 %s447, 0.3
      %s462 = sadd.f32 %s460, %s461
      %s463 = scalar_lea.smem [#allocation8], 0
      %464 = sst [smem:[%s463]] %s462
    $region153: #{tpu_custom_call.1} parent=1 // pred_fallthru
      _
    // Predicated region
    $region154: #{tpu_custom_call.1} parent=1 // pred_check
      _
    $region155: #{tpu_custom_call.1} parent=1 // pred_check_branch
      %466 = sbr.rel (0) target = $region157
    $region156: #{tpu_custom_call.1} parent=1 // pred_region
      %s468 = ssub.s32 16, 16
      %469 = vsyncadd [#allocation9], %s468
      %472 = dma.smem_to_hbm [#allocation8], 16, %s6, [#allocation9]
    $region157: #{tpu_custom_call.1} parent=1 // pred_fallthru
      _
    // Predicated region
    $region158: #{tpu_custom_call.1} parent=1 // pred_check
      _
    $region159: #{tpu_custom_call.1} parent=1 // pred_check_branch
      %474 = sbr.rel (0) target = $region161
    $region160: #{tpu_custom_call.1} parent=1 // pred_region
      %475 = dma.done [#allocation9], 16
    $region161: #{tpu_custom_call.1} parent=1 // pred_fallthru
      _
    %476 = sfence
    %477 = vsyncpa [#allocation9], 1
  %478 = vsyncmov [#allocation7]
  %s479 = vpop.sfrf %478
  %p480 = scmp.eq.s32.totalorder %s479, 0
  %p481 = pneg %p480
  %483 = shalt.err (%p481)
  %s484 = scalar_lea.sflag [#allocation7], 1
  %485 = vsyncmov %s484
  %s486 = vpop.sfrf %485
  %p487 = scmp.eq.s32.totalorder %s486, 0
  %p488 = pneg %p487
  %490 = shalt.err (%p488)
  %s491 = scalar_lea.sflag [#allocation7], 2
  %492 = vsyncmov %s491
  %s493 = vpop.sfrf %492
  %p494 = scmp.eq.s32.totalorder %s493, 0
  %p495 = pneg %p494
  %497 = shalt.err (%p495)
  %s498 = scalar_lea.sflag [#allocation7], 3
  %499 = vsyncmov %s498
  %s500 = vpop.sfrf %499
  %p501 = scmp.eq.s32.totalorder %s500, 0
  %p502 = pneg %p501
  %504 = shalt.err (%p502)

</llo_original>
